<compile_context>
chip_gen: v7x
topology: tpu7x:2x2x1
jax: 0.10.0
libtpu: 0.0.40
codegen_flags: <defaults>
</compile_context>

<pallas_src>
import jax
import jax.numpy as jnp
from jax.experimental import pallas as pl
from jax.experimental.pallas import tpu as pltpu

# ----- architecture (matches torchrl MLP with num_cells=[...] and Tanh activation) -----
ENC_SIZES = [256, 128, 64, 32, 16, 3]
DEC_SIZES = [3, 16, 32, 64, 128, 256]
N_ENC = len(ENC_SIZES) - 1      # 5 linear layers
N_DEC = len(DEC_SIZES) - 1      # 5 linear layers
N_LAYERS = N_ENC + N_DEC        # 10 linear layers total

# after fusing enc-L4 (16->3) with dec-L0 (3->16): 9 layers total,
#   layer 0      : 256 -> 128  (tanh)
#   layers 1..7  : 128 -> 128  (tanh), zero-padded from 64/32/16-wide layers
#   layer 8      : 128 -> 256  (no activation)
N_MID = 7

MAX_ROWS_PER_INPUT = 1024       # per-input row tile cap -> 2048 MXU rows per grid step


def _round_up(x, m):
    return ((x + m - 1) // m) * m


# --------------------------------------------------------------------------------------
# kernel
# --------------------------------------------------------------------------------------
def _mlp_module_kernel(x0_ref, x1_ref, w_in_ref, w_mid_ref, b_mid_ref, w_out_ref, b_out_ref,
                       o0_ref, o1_ref):
    """Fused 9-layer MLP chain on matching (row_tile, 256) blocks of desc0 and desc1.

    x0_ref/x1_ref : (rows, 256)   f32 activation blocks
    w_in_ref      : (256, 128)    bf16 layer-0 weight
    w_mid_ref     : (7, 128, 128) bf16 layers 1..7 weights (zero-padded, incl. fused bottleneck)
    b_mid_ref     : (8, 128)      f32 biases of layers 0..7 (zero-padded)
    w_out_ref     : (128, 256)    bf16 layer-8 weight
    b_out_ref     : (1, 256)      f32 layer-8 bias
    o0_ref/o1_ref : (rows, 256)   output blocks
    """
    rows = x0_ref.shape[0]

    # Concatenate the two input tiles in VMEM so every weight is pushed through the MXU
    # exactly once per grid step (no HBM-side concat in the wrapper).
    h32 = jnp.concatenate([x0_ref[...], x1_ref[...]], axis=0)        # (2*rows, 256) f32
    h = h32.astype(jnp.bfloat16)                                     # bf16 MXU operands

    acc = jnp.dot(h, w_in_ref[...], preferred_element_type=jnp.float32)
    acc = acc + b_mid_ref[0:1, :]                                    # static row slice
    h = jnp.tanh(acc).astype(jnp.bfloat16)

    for i in range(N_MID):           # unrolled 128x128 layers (incl. fused 16->3->16 bottleneck)
        acc = jnp.dot(h, w_mid_ref[i], preferred_element_type=jnp.float32)
        acc = acc + b_mid_ref[i + 1:i + 2, :]
        h = jnp.tanh(acc).astype(jnp.bfloat16)

    y = jnp.dot(h, w_out_ref[...], preferred_element_type=jnp.float32) + b_out_ref[...]
    y = y.astype(o0_ref.dtype)
    o0_ref[...] = y[:rows]
    o1_ref[...] = y[rows:]


# --------------------------------------------------------------------------------------
# parameter packing (fusion + lane padding + bf16 slab packing) — done once, outside kernel
# --------------------------------------------------------------------------------------
def pack_params(flat_params):
    """flat (w0, b0, ..., w9, b9) with w[i]:(in,out), b[i]:(1,out) -> 5 padded slabs.

    Weight slabs are stored bf16 (halves weight DMA); biases stay f32 (added post-accum).
    """
    ws = [jnp.asarray(flat_params[2 * i], jnp.float32) for i in range(N_LAYERS)]
    bs = [jnp.asarray(flat_params[2 * i + 1], jnp.float32) for i in range(N_LAYERS)]

    # fuse encoder-last (linear, no activation) into decoder-first (latent never escapes):
    #   y = (h @ We + be) @ Wd + bd  ==  h @ (We @ Wd) + (be @ Wd + bd)
    w_f = ws[4] @ ws[5]                       # (16, 16), computed in f32
    b_f = bs[4] @ ws[5] + bs[5]               # (1, 16)
    ws = ws[:4] + [w_f] + ws[6:]              # 9 layers
    bs = bs[:4] + [b_f] + bs[6:]

    def pad_to(a, rows, cols):
        return jnp.pad(a, ((0, rows - a.shape[0]), (0, cols - a.shape[1])))

    w_in = pad_to(ws[0], 256, 128).astype(jnp.bfloat16)                       # (256, 128)
    w_mid = jnp.stack([pad_to(w, 128, 128) for w in ws[1:8]], 0).astype(jnp.bfloat16)  # (7,128,128)
    b_mid = jnp.concatenate([pad_to(b, 1, 128) for b in bs[0:8]], 0)          # (8, 128) f32
    w_out = pad_to(ws[8], 128, 256).astype(jnp.bfloat16)                      # (128, 256)
    b_out = bs[8]                                                             # (1, 256) f32
    return (w_in, w_mid, b_mid, w_out, b_out)


# --------------------------------------------------------------------------------------
# wrapper
# --------------------------------------------------------------------------------------
@jax.jit
def mlp_module_forward(desc0, desc1, packed):
    """packed = pack_params(flat_params). Returns (dec(enc(desc0)), dec(enc(desc1)))."""
    # TODO(synk): for tiny-batch serving with static weights, keep the packed slabs
    # VMEM-resident across calls (cross-call prefetch) instead of re-DMAing per invocation.
    w_in, w_mid, b_mid, w_out, b_out = packed
    B = desc0.shape[0]

    if B <= 8:
        row_tile = B                                   # full-array block, grid=(1,)
    else:
        # >=2 grid steps so v7x megacore can shard rows; tile sized to leave <8 padded rows.
        n_steps = max(2, pl.cdiv(B, MAX_ROWS_PER_INPUT))
        row_tile = _round_up(pl.cdiv(B, n_steps), 8)
    grid = (pl.cdiv(B, row_tile),)

    act_spec = pl.BlockSpec((row_tile, 256), lambda i: (i, 0))     # tiled on rows
    const2 = lambda i: (0, 0)                                      # weights: VMEM-resident

    out0, out1 = pl.pallas_call(
        _mlp_module_kernel,
        out_shape=(jax.ShapeDtypeStruct((B, 256), desc0.dtype),
                   jax.ShapeDtypeStruct((B, 256), desc1.dtype)),
        grid=grid,
        in_specs=[
            act_spec,                                          # desc0 block
            act_spec,                                          # desc1 block
            pl.BlockSpec((256, 128), const2),                  # w_in
            pl.BlockSpec((N_MID, 128, 128), lambda i: (0, 0, 0)),  # w_mid
            pl.BlockSpec((8, 128), const2),                    # b_mid
            pl.BlockSpec((128, 256), const2),                  # w_out
            pl.BlockSpec((1, 256), const2),                    # b_out
        ],
        out_specs=(act_spec, act_spec),
        compiler_params=pltpu.CompilerParams(
            dimension_semantics=("parallel",),                 # shard rows across TCs (v7x)
            vmem_limit_bytes=48 * 1024 * 1024,                 # room for 1024-row tiles on all gens
        ),
    )(desc0, desc1, w_in, w_mid, b_mid, w_out, b_out)
    return out0, out1


# --------------------------------------------------------------------------------------
# init (matches nn.Linear's U(-1/sqrt(fan_in), 1/sqrt(fan_in)); weights stored [in, out])
# --------------------------------------------------------------------------------------
def init_params(key):
    sizes = list(zip(ENC_SIZES[:-1], ENC_SIZES[1:])) + list(zip(DEC_SIZES[:-1], DEC_SIZES[1:]))
    flat = []
    for (fan_in, fan_out) in sizes:
        key, kw, kb = jax.random.split(key, 3)
        bound = 1.0 / (fan_in ** 0.5)
        w = jax.random.uniform(kw, (fan_in, fan_out), jnp.float32, -bound, bound)
        b = jax.random.uniform(kb, (1, fan_out), jnp.float32, -bound, bound)
        flat += [w, b]
    return tuple(flat)


if __name__ == "__main__":
    key = jax.random.PRNGKey(0)
    k0, k1, kp = jax.random.split(key, 3)

    B = 8
    desc0 = jax.random.normal(k0, (B, 256), jnp.float32)
    desc1 = jax.random.normal(k1, (B, 256), jnp.float32)
    flat_params = init_params(kp)
    packed = pack_params(flat_params)

    out0, out1 = mlp_module_forward(desc0, desc1, packed)
    jax.block_until_ready((out0, out1))
    assert out0.shape == (B, 256) and out1.shape == (B, 256)

    # ---- tight check: kernel matches the identical bf16-operand / f32-accumulate math ----
    def ref_packed(x0, x1):
        w_in, w_mid, b_mid, w_out, b_out = packed
        h = jnp.concatenate([x0, x1], axis=0).astype(jnp.bfloat16)
        h = jnp.tanh(jnp.dot(h, w_in, preferred_element_type=jnp.float32)
                     + b_mid[0:1, :]).astype(jnp.bfloat16)
        for i in range(N_MID):
            h = jnp.tanh(jnp.dot(h, w_mid[i], preferred_element_type=jnp.float32)
                         + b_mid[i + 1:i + 2, :]).astype(jnp.bfloat16)
        y = jnp.dot(h, w_out, preferred_element_type=jnp.float32) + b_out
        return y[:x0.shape[0]], y[x0.shape[0]:]

    p0, p1 = ref_packed(desc0, desc1)
    assert jnp.allclose(out0, p0, atol=2e-3, rtol=2e-3)
    assert jnp.allclose(out1, p1, atol=2e-3, rtol=2e-3)

    # ---- loose check: matches the ORIGINAL (unfused, unpadded) f32 module math to bf16 acc ----
    def ref_mlp(h, start, n):
        for i in range(n):
            w, b = flat_params[2 * (start + i)], flat_params[2 * (start + i) + 1]
            h = h @ w + b
            if i < n - 1:
                h = jnp.tanh(h)
        return h

    r0 = ref_mlp(ref_mlp(desc0, 0, N_ENC), N_ENC, N_DEC)
    r1 = ref_mlp(ref_mlp(desc1, 0, N_ENC), N_ENC, N_DEC)
    assert jnp.allclose(out0, r0, atol=5e-2, rtol=5e-2)
    assert jnp.allclose(out1, r1, atol=5e-2, rtol=5e-2)

    print("KERNEL_OK")
</pallas_src>

<mosaic_0001>
module attributes {stable_mosaic.version = 11 : i64} {
  func.func @_mlp_module_kernel(%arg0: i32, %arg1: memref<8x256xf32, #tpu.memory_space<vmem>>, %arg2: memref<8x256xf32, #tpu.memory_space<vmem>>, %arg3: memref<256x128xbf16, #tpu.memory_space<vmem>>, %arg4: memref<7x128x128xbf16, #tpu.memory_space<vmem>>, %arg5: memref<8x128xf32, #tpu.memory_space<vmem>>, %arg6: memref<128x256xbf16, #tpu.memory_space<vmem>>, %arg7: memref<1x256xf32, #tpu.memory_space<vmem>>, %arg8: memref<8x256xf32, #tpu.memory_space<vmem>>, %arg9: memref<8x256xf32, #tpu.memory_space<vmem>>) attributes {dimension_semantics = [#tpu.dimension_semantics<parallel>], iteration_bounds = array<i64: 1>, scalar_prefetch = 0 : i64, scratch_operands = 0 : i64, tpu.core_type = #tpu.core_type<tc>, window_params = [{transform_indices = @transform_0, window_bounds = array<i64: 8, 256>}, {transform_indices = @transform_1, window_bounds = array<i64: 8, 256>}, {pipeline_mode = #tpu.pipeline_mode<synchronous>, transform_indices = @transform_2, window_bounds = array<i64: 256, 128>}, {pipeline_mode = #tpu.pipeline_mode<synchronous>, transform_indices = @transform_3, window_bounds = array<i64: 7, 128, 128>}, {pipeline_mode = #tpu.pipeline_mode<synchronous>, transform_indices = @transform_4, window_bounds = array<i64: 8, 128>}, {pipeline_mode = #tpu.pipeline_mode<synchronous>, transform_indices = @transform_5, window_bounds = array<i64: 128, 256>}, {pipeline_mode = #tpu.pipeline_mode<synchronous>, transform_indices = @transform_6, window_bounds = array<i64: 1, 256>}, {transform_indices = @transform_7, window_bounds = array<i64: 8, 256>}, {transform_indices = @transform_8, window_bounds = array<i64: 8, 256>}]} {
    %c0 = arith.constant 0 : index
    %c0_0 = arith.constant 0 : index
    %0 = vector.load %arg1[%c0, %c0_0] : memref<8x256xf32, #tpu.memory_space<vmem>>, vector<8x256xf32>
    %c0_1 = arith.constant 0 : index
    %c0_2 = arith.constant 0 : index
    %1 = vector.load %arg2[%c0_1, %c0_2] : memref<8x256xf32, #tpu.memory_space<vmem>>, vector<8x256xf32>
    %2 = tpu.concatenate %0, %1 in 0 : vector<8x256xf32>, vector<8x256xf32> -> vector<16x256xf32>
    %3 = arith.truncf %2 : vector<16x256xf32> to vector<16x256xbf16>
    %c0_3 = arith.constant 0 : index
    %c0_4 = arith.constant 0 : index
    %4 = vector.load %arg3[%c0_3, %c0_4] : memref<256x128xbf16, #tpu.memory_space<vmem>>, vector<256x128xbf16>
    %cst = arith.constant dense<0.000000e+00> : vector<16x128xf32>
    %5 = tpu.matmul %3, %4, %cst {dimension_numbers = #tpu.dot_dimension_numbers<[1], [0], [0], [1], [0, 0, 1, 1], [], []>} : vector<16x256xbf16>, vector<256x128xbf16>, vector<16x128xf32> -> vector<16x128xf32>
    %c0_5 = arith.constant 0 : index
    %c0_6 = arith.constant 0 : index
    %6 = vector.load %arg5[%c0_5, %c0_6] : memref<8x128xf32, #tpu.memory_space<vmem>>, vector<1x128xf32>
    %7 = vector.broadcast %6 : vector<1x128xf32> to vector<16x128xf32>
    %8 = arith.addf %5, %7 : vector<16x128xf32>
    %9 = math.tanh %8 : vector<16x128xf32>
    %10 = arith.truncf %9 : vector<16x128xf32> to vector<16x128xbf16>
    %c0_7 = arith.constant 0 : index
    %c0_8 = arith.constant 0 : index
    %c0_9 = arith.constant 0 : index
    %11 = vector.load %arg4[%c0_7, %c0_8, %c0_9] : memref<7x128x128xbf16, #tpu.memory_space<vmem>>, vector<1x128x128xbf16>
    %12 = vector.shape_cast %11 : vector<1x128x128xbf16> to vector<128x128xbf16>
    %cst_10 = arith.constant dense<0.000000e+00> : vector<16x128xf32>
    %13 = tpu.matmul %10, %12, %cst_10 {dimension_numbers = #tpu.dot_dimension_numbers<[1], [0], [0], [1], [0, 0, 1, 1], [], []>} : vector<16x128xbf16>, vector<128x128xbf16>, vector<16x128xf32> -> vector<16x128xf32>
    %c1 = arith.constant 1 : index
    %c0_11 = arith.constant 0 : index
    %14 = vector.load %arg5[%c1, %c0_11] : memref<8x128xf32, #tpu.memory_space<vmem>>, vector<1x128xf32>
    %15 = vector.broadcast %14 : vector<1x128xf32> to vector<16x128xf32>
    %16 = arith.addf %13, %15 : vector<16x128xf32>
    %17 = math.tanh %16 : vector<16x128xf32>
    %18 = arith.truncf %17 : vector<16x128xf32> to vector<16x128xbf16>
    %c1_12 = arith.constant 1 : index
    %c0_13 = arith.constant 0 : index
    %c0_14 = arith.constant 0 : index
    %19 = vector.load %arg4[%c1_12, %c0_13, %c0_14] : memref<7x128x128xbf16, #tpu.memory_space<vmem>>, vector<1x128x128xbf16>
    %20 = vector.shape_cast %19 : vector<1x128x128xbf16> to vector<128x128xbf16>
    %cst_15 = arith.constant dense<0.000000e+00> : vector<16x128xf32>
    %21 = tpu.matmul %18, %20, %cst_15 {dimension_numbers = #tpu.dot_dimension_numbers<[1], [0], [0], [1], [0, 0, 1, 1], [], []>} : vector<16x128xbf16>, vector<128x128xbf16>, vector<16x128xf32> -> vector<16x128xf32>
    %c2 = arith.constant 2 : index
    %c0_16 = arith.constant 0 : index
    %22 = vector.load %arg5[%c2, %c0_16] : memref<8x128xf32, #tpu.memory_space<vmem>>, vector<1x128xf32>
    %23 = vector.broadcast %22 : vector<1x128xf32> to vector<16x128xf32>
    %24 = arith.addf %21, %23 : vector<16x128xf32>
    %25 = math.tanh %24 : vector<16x128xf32>
    %26 = arith.truncf %25 : vector<16x128xf32> to vector<16x128xbf16>
    %c2_17 = arith.constant 2 : index
    %c0_18 = arith.constant 0 : index
    %c0_19 = arith.constant 0 : index
    %27 = vector.load %arg4[%c2_17, %c0_18, %c0_19] : memref<7x128x128xbf16, #tpu.memory_space<vmem>>, vector<1x128x128xbf16>
    %28 = vector.shape_cast %27 : vector<1x128x128xbf16> to vector<128x128xbf16>
    %cst_20 = arith.constant dense<0.000000e+00> : vector<16x128xf32>
    %29 = tpu.matmul %26, %28, %cst_20 {dimension_numbers = #tpu.dot_dimension_numbers<[1], [0], [0], [1], [0, 0, 1, 1], [], []>} : vector<16x128xbf16>, vector<128x128xbf16>, vector<16x128xf32> -> vector<16x128xf32>
    %c3 = arith.constant 3 : index
    %c0_21 = arith.constant 0 : index
    %30 = vector.load %arg5[%c3, %c0_21] : memref<8x128xf32, #tpu.memory_space<vmem>>, vector<1x128xf32>
    %31 = vector.broadcast %30 : vector<1x128xf32> to vector<16x128xf32>
    %32 = arith.addf %29, %31 : vector<16x128xf32>
    %33 = math.tanh %32 : vector<16x128xf32>
    %34 = arith.truncf %33 : vector<16x128xf32> to vector<16x128xbf16>
    %c3_22 = arith.constant 3 : index
    %c0_23 = arith.constant 0 : index
    %c0_24 = arith.constant 0 : index
    %35 = vector.load %arg4[%c3_22, %c0_23, %c0_24] : memref<7x128x128xbf16, #tpu.memory_space<vmem>>, vector<1x128x128xbf16>
    %36 = vector.shape_cast %35 : vector<1x128x128xbf16> to vector<128x128xbf16>
    %cst_25 = arith.constant dense<0.000000e+00> : vector<16x128xf32>
    %37 = tpu.matmul %34, %36, %cst_25 {dimension_numbers = #tpu.dot_dimension_numbers<[1], [0], [0], [1], [0, 0, 1, 1], [], []>} : vector<16x128xbf16>, vector<128x128xbf16>, vector<16x128xf32> -> vector<16x128xf32>
    %c4 = arith.constant 4 : index
    %c0_26 = arith.constant 0 : index
    %38 = vector.load %arg5[%c4, %c0_26] : memref<8x128xf32, #tpu.memory_space<vmem>>, vector<1x128xf32>
    %39 = vector.broadcast %38 : vector<1x128xf32> to vector<16x128xf32>
    %40 = arith.addf %37, %39 : vector<16x128xf32>
    %41 = math.tanh %40 : vector<16x128xf32>
    %42 = arith.truncf %41 : vector<16x128xf32> to vector<16x128xbf16>
    %c4_27 = arith.constant 4 : index
    %c0_28 = arith.constant 0 : index
    %c0_29 = arith.constant 0 : index
    %43 = vector.load %arg4[%c4_27, %c0_28, %c0_29] : memref<7x128x128xbf16, #tpu.memory_space<vmem>>, vector<1x128x128xbf16>
    %44 = vector.shape_cast %43 : vector<1x128x128xbf16> to vector<128x128xbf16>
    %cst_30 = arith.constant dense<0.000000e+00> : vector<16x128xf32>
    %45 = tpu.matmul %42, %44, %cst_30 {dimension_numbers = #tpu.dot_dimension_numbers<[1], [0], [0], [1], [0, 0, 1, 1], [], []>} : vector<16x128xbf16>, vector<128x128xbf16>, vector<16x128xf32> -> vector<16x128xf32>
    %c5 = arith.constant 5 : index
    %c0_31 = arith.constant 0 : index
    %46 = vector.load %arg5[%c5, %c0_31] : memref<8x128xf32, #tpu.memory_space<vmem>>, vector<1x128xf32>
    %47 = vector.broadcast %46 : vector<1x128xf32> to vector<16x128xf32>
    %48 = arith.addf %45, %47 : vector<16x128xf32>
    %49 = math.tanh %48 : vector<16x128xf32>
    %50 = arith.truncf %49 : vector<16x128xf32> to vector<16x128xbf16>
    %c5_32 = arith.constant 5 : index
    %c0_33 = arith.constant 0 : index
    %c0_34 = arith.constant 0 : index
    %51 = vector.load %arg4[%c5_32, %c0_33, %c0_34] : memref<7x128x128xbf16, #tpu.memory_space<vmem>>, vector<1x128x128xbf16>
    %52 = vector.shape_cast %51 : vector<1x128x128xbf16> to vector<128x128xbf16>
    %cst_35 = arith.constant dense<0.000000e+00> : vector<16x128xf32>
    %53 = tpu.matmul %50, %52, %cst_35 {dimension_numbers = #tpu.dot_dimension_numbers<[1], [0], [0], [1], [0, 0, 1, 1], [], []>} : vector<16x128xbf16>, vector<128x128xbf16>, vector<16x128xf32> -> vector<16x128xf32>
    %c6 = arith.constant 6 : index
    %c0_36 = arith.constant 0 : index
    %54 = vector.load %arg5[%c6, %c0_36] : memref<8x128xf32, #tpu.memory_space<vmem>>, vector<1x128xf32>
    %55 = vector.broadcast %54 : vector<1x128xf32> to vector<16x128xf32>
    %56 = arith.addf %53, %55 : vector<16x128xf32>
    %57 = math.tanh %56 : vector<16x128xf32>
    %58 = arith.truncf %57 : vector<16x128xf32> to vector<16x128xbf16>
    %c6_37 = arith.constant 6 : index
    %c0_38 = arith.constant 0 : index
    %c0_39 = arith.constant 0 : index
    %59 = vector.load %arg4[%c6_37, %c0_38, %c0_39] : memref<7x128x128xbf16, #tpu.memory_space<vmem>>, vector<1x128x128xbf16>
    %60 = vector.shape_cast %59 : vector<1x128x128xbf16> to vector<128x128xbf16>
    %cst_40 = arith.constant dense<0.000000e+00> : vector<16x128xf32>
    %61 = tpu.matmul %58, %60, %cst_40 {dimension_numbers = #tpu.dot_dimension_numbers<[1], [0], [0], [1], [0, 0, 1, 1], [], []>} : vector<16x128xbf16>, vector<128x128xbf16>, vector<16x128xf32> -> vector<16x128xf32>
    %c7 = arith.constant 7 : index
    %c0_41 = arith.constant 0 : index
    %62 = vector.load %arg5[%c7, %c0_41] : memref<8x128xf32, #tpu.memory_space<vmem>>, vector<1x128xf32>
    %63 = vector.broadcast %62 : vector<1x128xf32> to vector<16x128xf32>
    %64 = arith.addf %61, %63 : vector<16x128xf32>
    %65 = math.tanh %64 : vector<16x128xf32>
    %66 = arith.truncf %65 : vector<16x128xf32> to vector<16x128xbf16>
    %c0_42 = arith.constant 0 : index
    %c0_43 = arith.constant 0 : index
    %67 = vector.load %arg6[%c0_42, %c0_43] : memref<128x256xbf16, #tpu.memory_space<vmem>>, vector<128x256xbf16>
    %cst_44 = arith.constant dense<0.000000e+00> : vector<16x256xf32>
    %68 = tpu.matmul %66, %67, %cst_44 {dimension_numbers = #tpu.dot_dimension_numbers<[1], [0], [0], [1], [0, 0, 1, 1], [], []>} : vector<16x128xbf16>, vector<128x256xbf16>, vector<16x256xf32> -> vector<16x256xf32>
    %c0_45 = arith.constant 0 : index
    %c0_46 = arith.constant 0 : index
    %69 = vector.load %arg7[%c0_45, %c0_46] : memref<1x256xf32, #tpu.memory_space<vmem>>, vector<1x256xf32>
    %70 = vector.broadcast %69 : vector<1x256xf32> to vector<16x256xf32>
    %71 = arith.addf %68, %70 : vector<16x256xf32>
    %72 = vector.extract_strided_slice %71 {offsets = [0, 0], sizes = [8, 256], strides = [1, 1]} : vector<16x256xf32> to vector<8x256xf32>
    %c0_47 = arith.constant 0 : index
    %c0_48 = arith.constant 0 : index
    %73 = vector.load %arg8[%c0_47, %c0_48] : memref<8x256xf32, #tpu.memory_space<vmem>>, vector<8x256xf32>
    tpu.vector_store %arg8[%c0_47, %c0_48], %72 {strides = array<i32>} : memref<8x256xf32, #tpu.memory_space<vmem>>, vector<8x256xf32>,
    %74 = vector.extract_strided_slice %71 {offsets = [8, 0], sizes = [8, 256], strides = [1, 1]} : vector<16x256xf32> to vector<8x256xf32>
    %c0_49 = arith.constant 0 : index
    %c0_50 = arith.constant 0 : index
    %75 = vector.load %arg9[%c0_49, %c0_50] : memref<8x256xf32, #tpu.memory_space<vmem>>, vector<8x256xf32>
    tpu.vector_store %arg9[%c0_49, %c0_50], %74 {strides = array<i32>} : memref<8x256xf32, #tpu.memory_space<vmem>>, vector<8x256xf32>,
    return
  }
  func.func @transform_0(%arg0: i32) -> (i32, i32) {
    %c0_i32 = arith.constant 0 : i32
    %c0_i32_0 = arith.constant 0 : i32
    return %arg0, %c0_i32 : i32, i32
  }
  func.func @transform_1(%arg0: i32) -> (i32, i32) {
    %c0_i32 = arith.constant 0 : i32
    %c0_i32_0 = arith.constant 0 : i32
    return %arg0, %c0_i32 : i32, i32
  }
  func.func @transform_2(%arg0: i32) -> (i32, i32) {
    %c0_i32 = arith.constant 0 : i32
    %c0_i32_0 = arith.constant 0 : i32
    %c0_i32_1 = arith.constant 0 : i32
    return %c0_i32, %c0_i32_0 : i32, i32
  }
  func.func @transform_3(%arg0: i32) -> (i32, i32, i32) {
    %c0_i32 = arith.constant 0 : i32
    %c0_i32_0 = arith.constant 0 : i32
    %c0_i32_1 = arith.constant 0 : i32
    %c0_i32_2 = arith.constant 0 : i32
    return %c0_i32, %c0_i32_0, %c0_i32_1 : i32, i32, i32
  }
  func.func @transform_4(%arg0: i32) -> (i32, i32) {
    %c0_i32 = arith.constant 0 : i32
    %c0_i32_0 = arith.constant 0 : i32
    %c0_i32_1 = arith.constant 0 : i32
    return %c0_i32, %c0_i32_0 : i32, i32
  }
  func.func @transform_5(%arg0: i32) -> (i32, i32) {
    %c0_i32 = arith.constant 0 : i32
    %c0_i32_0 = arith.constant 0 : i32
    %c0_i32_1 = arith.constant 0 : i32
    return %c0_i32, %c0_i32_0 : i32, i32
  }
  func.func @transform_6(%arg0: i32) -> (i32, i32) {
    %c0_i32 = arith.constant 0 : i32
    %c0_i32_0 = arith.constant 0 : i32
    %c0_i32_1 = arith.constant 0 : i32
    return %c0_i32, %c0_i32_0 : i32, i32
  }
  func.func @transform_7(%arg0: i32) -> (i32, i32) {
    %c0_i32 = arith.constant 0 : i32
    %c0_i32_0 = arith.constant 0 : i32
    return %arg0, %c0_i32 : i32, i32
  }
  func.func @transform_8(%arg0: i32) -> (i32, i32) {
    %c0_i32 = arith.constant 0 : i32
    %c0_i32_0 = arith.constant 0 : i32
    return %arg0, %c0_i32 : i32, i32
  }
}

</mosaic_0001>

<llo_original>
// kernel: mlp_module_forward.1
$region0: #{mlp_module_forward.1}
  #allocation0 [shape = 'u32[]', space=smem, size = 0x4, offset = 0x4, fixed_abs, tag = 'smem constant byte address 0x4 - core index']
  #allocation1 [shape = 'u32[144,128]{1,0:T(1,128)}', space=vmem, size = 0x12000, scoped, tag = 'internal scratch']
  %s0 = inlined_call_operand.hbm [shape: f32[8,256], index: 0, kind: input, shape index: {}]
  %s1 = inlined_call_operand.hbm [shape: f32[8,256], index: 1, kind: input, shape index: {}]
  %s2 = inlined_call_operand.hbm [shape: bf16[256,128], index: 2, kind: input, shape index: {}]
  %s3 = inlined_call_operand.hbm [shape: bf16[7,128,128], index: 3, kind: input, shape index: {}]
  %s4 = inlined_call_operand.vmem [shape: f32[8,128], index: 4, kind: input, shape index: {}]
  %s5 = inlined_call_operand.hbm [shape: bf16[128,256], index: 5, kind: input, shape index: {}]
  %s6 = inlined_call_operand.vmem [shape: f32[1,256], index: 6, kind: input, shape index: {}]
  %s7 = inlined_call_operand.hbm [shape: f32[8,256], index: 7, kind: output, shape index: {0}]
  %s8 = inlined_call_operand.hbm [shape: f32[8,256], index: 8, kind: output, shape index: {1}]
  %9 = xla_tuple %s7, %s8
  %s10 = sld [smem:[#allocation0]]
  $region66: #{mlp_module_forward.1} parent=0
    _
  %s12 = ssub.s32 1, %s10
  %s13 = scalar_select 0, %s12, %s10
  $region1: #{mlp_module_forward.1} parent=0
    #allocation2 [shape = 'u8[8192]{0}', space=vmem, size = 0x2000, scoped, tag = 'input window, operand 0, single buffered']
    #allocation3 [shape = 's32[1]{0}', space=sflag, size = 0x4, scoped, tag = 'scoped memory for mlp_module_forward.1']
    #allocation4 [shape = 's32[1]{0}', space=sflag, size = 0x4, scoped, tag = 'scoped memory for mlp_module_forward.1']
    #allocation5 [shape = 'u8[8192]{0}', space=vmem, size = 0x2000, scoped, tag = 'input window, operand 1, single buffered']
    #allocation6 [shape = 's32[1]{0}', space=sflag, size = 0x4, scoped, tag = 'scoped memory for mlp_module_forward.1']
    #allocation7 [shape = 'u8[65536]{0}', space=vmem, size = 0x10000, scoped, tag = 'input window, operand 2, single buffered']
    #allocation8 [shape = 'u8[229376]{0}', space=vmem, size = 0x38000, scoped, tag = 'input window, operand 3, single buffered']
    #allocation9 [shape = 's32[1]{0}', space=sflag, size = 0x4, scoped, tag = 'scoped memory for mlp_module_forward.1']
    #allocation10 [shape = 'u8[65536]{0}', space=vmem, size = 0x10000, scoped, tag = 'input window, operand 5, single buffered']
    #allocation11 [shape = 'u8[8192]{0}', space=vmem, size = 0x2000, scoped, tag = 'output window, operand 0, single buffered']
    #allocation12 [shape = 'u8[8192]{0}', space=vmem, size = 0x2000, scoped, tag = 'output window, operand 1, single buffered']
    #allocation13 [shape = 's32[1]{0}', space=sflag, size = 0x4, scoped, tag = 'scoped memory for mlp_module_forward.1']
    %14 = vsyncpa [#allocation3], 0
    %15 = vsyncpa [#allocation6], 0
    %16 = vsyncpa [#allocation9], 0
    %17 = vsyncpa [#allocation4], 0
    %18 = vsyncpa [#allocation13], 0
    // Predicated region
    $region2: #{mlp_module_forward.1} parent=1 // pred_check
      _
    $region3: #{mlp_module_forward.1} parent=1 // pred_check_branch
      %20 = sbr.rel (0) target = $region5
    $region4: #{mlp_module_forward.1} parent=1 // pred_region
      %s22 = ssub.s32 256, 256
      %23 = vsyncadd [#allocation3], %s22
      %s25 = sshll.u32 [#allocation2], 4
      %s26 = int_to_ptr.vmem [resolvable:$true] %s25
      %28 = dma.hbm_to_vmem [thread:$0]  %s0, 256, %s26, [#allocation3]
    $region5: #{mlp_module_forward.1} parent=1 // pred_fallthru
      _
    // Predicated region
    $region6: #{mlp_module_forward.1} parent=1 // pred_check
      _
    $region7: #{mlp_module_forward.1} parent=1 // pred_check_branch
      %30 = sbr.rel (0) target = $region9
    $region8: #{mlp_module_forward.1} parent=1 // pred_region
      %s32 = ssub.s32 256, 256
      %33 = vsyncadd [#allocation6], %s32
      %s35 = sshll.u32 [#allocation5], 4
      %s36 = int_to_ptr.vmem [resolvable:$true] %s35
      %38 = dma.hbm_to_vmem [thread:$0]  %s1, 256, %s36, [#allocation6]
    $region9: #{mlp_module_forward.1} parent=1 // pred_fallthru
      _
    // Predicated region
    $region10: #{mlp_module_forward.1} parent=1 // pred_check
      _
    $region11: #{mlp_module_forward.1} parent=1 // pred_check_branch
      %40 = sbr.rel (0) target = $region13
    $region12: #{mlp_module_forward.1} parent=1 // pred_region
      %s42 = ssub.s32 2048, 2048
      %43 = vsyncadd [#allocation6], %s42
      %s44 = sshll.u32 [#allocation7], 4
      %s45 = int_to_ptr.vmem [resolvable:$true] %s44
      %50 = dma.hbm_to_vmem [thread:$0]  %s2, 2048, %s45, [#allocation6], 64, 64, 4
    $region13: #{mlp_module_forward.1} parent=1 // pred_fallthru
      _
    // Predicated region
    $region14: #{mlp_module_forward.1} parent=1 // pred_check
      _
    $region15: #{mlp_module_forward.1} parent=1 // pred_check_branch
      %52 = sbr.rel (0) target = $region17
    $region16: #{mlp_module_forward.1} parent=1 // pred_region
      %s54 = ssub.s32 7168, 7168
      %55 = vsyncadd [#allocation9], %s54
      %s56 = sshll.u32 [#allocation8], 4
      %s57 = int_to_ptr.vmem [resolvable:$true] %s56
      %62 = dma.hbm_to_vmem [thread:$0]  %s3, 7168, %s57, [#allocation9], 64, 64, 4
    $region17: #{mlp_module_forward.1} parent=1 // pred_fallthru
      _
    // Predicated region
    $region18: #{mlp_module_forward.1} parent=1 // pred_check
      _
    $region19: #{mlp_module_forward.1} parent=1 // pred_check_branch
      %64 = sbr.rel (0) target = $region21
    $region20: #{mlp_module_forward.1} parent=1 // pred_region
      _
    $region21: #{mlp_module_forward.1} parent=1 // pred_fallthru
      _
    // Predicated region
    $region22: #{mlp_module_forward.1} parent=1 // pred_check
      _
    $region23: #{mlp_module_forward.1} parent=1 // pred_check_branch
      %66 = sbr.rel (0) target = $region25
    $region24: #{mlp_module_forward.1} parent=1 // pred_region
      %s68 = ssub.s32 2048, 2048
      %69 = vsyncadd [#allocation9], %s68
      %s70 = sshll.u32 [#allocation10], 4
      %s71 = int_to_ptr.vmem [resolvable:$true] %s70
      %76 = dma.hbm_to_vmem [thread:$0]  %s5, 2048, %s71, [#allocation9], 128, 128, 8
    $region25: #{mlp_module_forward.1} parent=1 // pred_fallthru
      _
    // Predicated region
    $region26: #{mlp_module_forward.1} parent=1 // pred_check
      _
    $region27: #{mlp_module_forward.1} parent=1 // pred_check_branch
      %78 = sbr.rel (0) target = $region29
    $region28: #{mlp_module_forward.1} parent=1 // pred_region
      _
    $region29: #{mlp_module_forward.1} parent=1 // pred_fallthru
      _
    // Predicated region
    $region30: #{mlp_module_forward.1} parent=1 // pred_check
      _
    $region31: #{mlp_module_forward.1} parent=1 // pred_check_branch
      %80 = sbr.rel (0) target = $region33
    $region32: #{mlp_module_forward.1} parent=1 // pred_region
      %81 = dma.done [#allocation3], 256
    $region33: #{mlp_module_forward.1} parent=1 // pred_fallthru
      _
    // Predicated region
    $region34: #{mlp_module_forward.1} parent=1 // pred_check
      _
    $region35: #{mlp_module_forward.1} parent=1 // pred_check_branch
      %83 = sbr.rel (0) target = $region37
    $region36: #{mlp_module_forward.1} parent=1 // pred_region
      %84 = dma.done [#allocation6], 256
    $region37: #{mlp_module_forward.1} parent=1 // pred_fallthru
      _
    // Predicated region
    $region38: #{mlp_module_forward.1} parent=1 // pred_check
      _
    $region39: #{mlp_module_forward.1} parent=1 // pred_check_branch
      %86 = sbr.rel (0) target = $region41
    $region40: #{mlp_module_forward.1} parent=1 // pred_region
      %87 = dma.done [#allocation6], 2048
    $region41: #{mlp_module_forward.1} parent=1 // pred_fallthru
      _
    // Predicated region
    $region42: #{mlp_module_forward.1} parent=1 // pred_check
      _
    $region43: #{mlp_module_forward.1} parent=1 // pred_check_branch
      %89 = sbr.rel (0) target = $region45
    $region44: #{mlp_module_forward.1} parent=1 // pred_region
      %90 = dma.done [#allocation9], 7168
    $region45: #{mlp_module_forward.1} parent=1 // pred_fallthru
      _
    // Predicated region
    $region46: #{mlp_module_forward.1} parent=1 // pred_check
      _
    $region47: #{mlp_module_forward.1} parent=1 // pred_check_branch
      %92 = sbr.rel (0) target = $region49
    $region48: #{mlp_module_forward.1} parent=1 // pred_region
      %93 = dma.done [#allocation9], 2048
    $region49: #{mlp_module_forward.1} parent=1 // pred_fallthru
      _
    %v95 = vld [vmem:[#allocation2] sm:$0xff]
    %v96 = vld [vmem:[#allocation2 + $0x8] sm:$0xff]
    %v97 = vld [vmem:[#allocation5] sm:$0xff]
    %v98 = vld [vmem:[#allocation5 + $0x8] sm:$0xff]
    %v99 = vpack.c.bf16 %v97, %v95
    %v100 = vpack.c.bf16 %v98, %v96
    %v101 = vld [vmem:[#allocation7] sm:$0xf]
    %v102 = vld [vmem:[#allocation7 + $0x4] sm:$0xf]
    %v103 = vld [vmem:[#allocation7 + $0x8] sm:$0xf]
    %v104 = vld [vmem:[#allocation7 + $0xc] sm:$0xf]
    %v105 = vld [vmem:[#allocation7 + $0x10] sm:$0xf]
    %v106 = vld [vmem:[#allocation7 + $0x14] sm:$0xf]
    %v107 = vld [vmem:[#allocation7 + $0x18] sm:$0xf]
    %v108 = vld [vmem:[#allocation7 + $0x1c] sm:$0xf]
    %v109 = vld [vmem:[#allocation7 + $0x20] sm:$0xf]
    %v110 = vld [vmem:[#allocation7 + $0x24] sm:$0xf]
    %v111 = vld [vmem:[#allocation7 + $0x28] sm:$0xf]
    %v112 = vld [vmem:[#allocation7 + $0x2c] sm:$0xf]
    %v113 = vld [vmem:[#allocation7 + $0x30] sm:$0xf]
    %v114 = vld [vmem:[#allocation7 + $0x34] sm:$0xf]
    %v115 = vld [vmem:[#allocation7 + $0x38] sm:$0xf]
    %v116 = vld [vmem:[#allocation7 + $0x3c] sm:$0xf]
    %v117 = vld [vmem:[#allocation7 + $0x40] sm:$0xf]
    %v118 = vld [vmem:[#allocation7 + $0x44] sm:$0xf]
    %v119 = vld [vmem:[#allocation7 + $0x48] sm:$0xf]
    %v120 = vld [vmem:[#allocation7 + $0x4c] sm:$0xf]
    %v121 = vld [vmem:[#allocation7 + $0x50] sm:$0xf]
    %v122 = vld [vmem:[#allocation7 + $0x54] sm:$0xf]
    %v123 = vld [vmem:[#allocation7 + $0x58] sm:$0xf]
    %v124 = vld [vmem:[#allocation7 + $0x5c] sm:$0xf]
    %v125 = vld [vmem:[#allocation7 + $0x60] sm:$0xf]
    %v126 = vld [vmem:[#allocation7 + $0x64] sm:$0xf]
    %v127 = vld [vmem:[#allocation7 + $0x68] sm:$0xf]
    %v128 = vld [vmem:[#allocation7 + $0x6c] sm:$0xf]
    %v129 = vld [vmem:[#allocation7 + $0x70] sm:$0xf]
    %v130 = vld [vmem:[#allocation7 + $0x74] sm:$0xf]
    %v131 = vld [vmem:[#allocation7 + $0x78] sm:$0xf]
    %v132 = vld [vmem:[#allocation7 + $0x7c] sm:$0xf]
    %v133 = vld [vmem:[%s4] sm:$0x1]
    %v134 = vlaneseq
    %v135 = vshrl.u32 %v134, 7
    %v136 = vsub.s32 0, %v135
    %v137 = vrot.slane %v133, %v136
    %v170 = vunpack.c.l.b16 %v101
    %v171 = vunpack.c.l.b16 %v102
    %v172 = vunpack.c.l.b16 %v103
    %v173 = vunpack.c.l.b16 %v104
    %v174 = vunpack.c.l.b16 %v105
    %v175 = vunpack.c.l.b16 %v106
    %v176 = vunpack.c.l.b16 %v107
    %v177 = vunpack.c.l.b16 %v108
    %v178 = vunpack.c.l.b16 %v109
    %v179 = vunpack.c.l.b16 %v110
    %v180 = vunpack.c.l.b16 %v111
    %v181 = vunpack.c.l.b16 %v112
    %v182 = vunpack.c.l.b16 %v113
    %v183 = vunpack.c.l.b16 %v114
    %v184 = vunpack.c.l.b16 %v115
    %v185 = vunpack.c.l.b16 %v116
    %v186 = vunpack.c.l.b16 %v117
    %v187 = vunpack.c.l.b16 %v118
    %v188 = vunpack.c.l.b16 %v119
    %v189 = vunpack.c.l.b16 %v120
    %v190 = vunpack.c.l.b16 %v121
    %v191 = vunpack.c.l.b16 %v122
    %v192 = vunpack.c.l.b16 %v123
    %v193 = vunpack.c.l.b16 %v124
    %v194 = vunpack.c.l.b16 %v125
    %v195 = vunpack.c.l.b16 %v126
    %v196 = vunpack.c.l.b16 %v127
    %v197 = vunpack.c.l.b16 %v128
    %v198 = vunpack.c.l.b16 %v129
    %v199 = vunpack.c.l.b16 %v130
    %v200 = vunpack.c.l.b16 %v131
    %v201 = vunpack.c.l.b16 %v132
    %v202 = vpack.c.b16 %v171, %v170
    %v203 = vpack.c.b16 %v173, %v172
    %v204 = vpack.c.b16 %v175, %v174
    %v205 = vpack.c.b16 %v177, %v176
    %v206 = vpack.c.b16 %v179, %v178
    %v207 = vpack.c.b16 %v181, %v180
    %v208 = vpack.c.b16 %v183, %v182
    %v209 = vpack.c.b16 %v185, %v184
    %v210 = vpack.c.b16 %v187, %v186
    %v211 = vpack.c.b16 %v189, %v188
    %v212 = vpack.c.b16 %v191, %v190
    %v213 = vpack.c.b16 %v193, %v192
    %v214 = vpack.c.b16 %v195, %v194
    %v215 = vpack.c.b16 %v197, %v196
    %v216 = vpack.c.b16 %v199, %v198
    %v217 = vpack.c.b16 %v201, %v200
    %234 = vmatprep.subr.bf16.mxu0 0
    %235 = vmatpush1.bf16.msra.mxu0 %v202
    %236 = vmatprep.subr.bf16.mxu0 0
    %237 = vmatpush1.bf16.msra.mxu0 %v203
    %238 = vmatprep.subr.bf16.mxu0 0
    %239 = vmatpush1.bf16.msra.mxu0 %v204
    %240 = vmatprep.subr.bf16.mxu0 0
    %241 = vmatpush1.bf16.msra.mxu0 %v205
    %242 = vmatprep.subr.bf16.mxu0 0
    %243 = vmatpush1.bf16.msra.mxu0 %v206
    %244 = vmatprep.subr.bf16.mxu0 0
    %245 = vmatpush1.bf16.msra.mxu0 %v207
    %246 = vmatprep.subr.bf16.mxu0 0
    %247 = vmatpush1.bf16.msra.mxu0 %v208
    %248 = vmatprep.subr.bf16.mxu0 0
    %249 = vmatpush1.bf16.msra.mxu0 %v209
    %250 = vmatprep.subr.bf16.mxu0 0
    %251 = vmatpush1.bf16.msra.mxu0 %v210
    %252 = vmatprep.subr.bf16.mxu0 0
    %253 = vmatpush1.bf16.msra.mxu0 %v211
    %254 = vmatprep.subr.bf16.mxu0 0
    %255 = vmatpush1.bf16.msra.mxu0 %v212
    %256 = vmatprep.subr.bf16.mxu0 0
    %257 = vmatpush1.bf16.msra.mxu0 %v213
    %258 = vmatprep.subr.bf16.mxu0 0
    %259 = vmatpush1.bf16.msra.mxu0 %v214
    %260 = vmatprep.subr.bf16.mxu0 0
    %261 = vmatpush1.bf16.msra.mxu0 %v215
    %262 = vmatprep.subr.bf16.mxu0 0
    %263 = vmatpush1.bf16.msra.mxu0 %v216
    %264 = vmatprep.subr.bf16.mxu0 0
    %265 = vmatpush1.bf16.msra.mxu0 %v217
    %266 = vmatprep.mubr.bf16.mxu0 %v100
    %267 = vmatmul.mubr.bf16.gmra.mrb[0].mxu0 %v99
    %v268 = vpop.f32.mrb[0].mxu0
    %v269 = vadd.f32 %v137, %v268
    %v270 = vpop.f32.mrb[0].mxu0
    %v271 = vpop.f32.mrb[0].mxu0
    %v272 = vadd.f32 %v137, %v271
    %v273 = vpop.f32.mrb[0].mxu0
    %274 = vdwg.mxu0
    %v275 = vtanh.pop %v269
    %v276 = vtanh.pop %v272
    %v277 = vpack.c.bf16 %v276, %v275
    %v278 = vld [vmem:[#allocation8] sm:$0xf]
    %v279 = vld [vmem:[#allocation8 + $0x4] sm:$0xf]
    %v280 = vld [vmem:[#allocation8 + $0x8] sm:$0xf]
    %v281 = vld [vmem:[#allocation8 + $0xc] sm:$0xf]
    %v282 = vld [vmem:[#allocation8 + $0x10] sm:$0xf]
    %v283 = vld [vmem:[#allocation8 + $0x14] sm:$0xf]
    %v284 = vld [vmem:[#allocation8 + $0x18] sm:$0xf]
    %v285 = vld [vmem:[#allocation8 + $0x1c] sm:$0xf]
    %v286 = vld [vmem:[#allocation8 + $0x20] sm:$0xf]
    %v287 = vld [vmem:[#allocation8 + $0x24] sm:$0xf]
    %v288 = vld [vmem:[#allocation8 + $0x28] sm:$0xf]
    %v289 = vld [vmem:[#allocation8 + $0x2c] sm:$0xf]
    %v290 = vld [vmem:[#allocation8 + $0x30] sm:$0xf]
    %v291 = vld [vmem:[#allocation8 + $0x34] sm:$0xf]
    %v292 = vld [vmem:[#allocation8 + $0x38] sm:$0xf]
    %v293 = vld [vmem:[#allocation8 + $0x3c] sm:$0xf]
    %v294 = vld [vmem:[%s4 + $0x1] sm:$0x1]
    %v295 = vlaneseq
    %v296 = vshrl.u32 %v295, 7
    %v297 = vsub.s32 0, %v296
    %v298 = vrot.slane %v294, %v297
    %v315 = vunpack.c.l.b16 %v278
    %v316 = vunpack.c.l.b16 %v279
    %v317 = vunpack.c.l.b16 %v280
    %v318 = vunpack.c.l.b16 %v281
    %v319 = vunpack.c.l.b16 %v282
    %v320 = vunpack.c.l.b16 %v283
    %v321 = vunpack.c.l.b16 %v284
    %v322 = vunpack.c.l.b16 %v285
    %v323 = vunpack.c.l.b16 %v286
    %v324 = vunpack.c.l.b16 %v287
    %v325 = vunpack.c.l.b16 %v288
    %v326 = vunpack.c.l.b16 %v289
    %v327 = vunpack.c.l.b16 %v290
    %v328 = vunpack.c.l.b16 %v291
    %v329 = vunpack.c.l.b16 %v292
    %v330 = vunpack.c.l.b16 %v293
    %v331 = vpack.c.b16 %v316, %v315
    %v332 = vpack.c.b16 %v318, %v317
    %v333 = vpack.c.b16 %v320, %v319
    %v334 = vpack.c.b16 %v322, %v321
    %v335 = vpack.c.b16 %v324, %v323
    %v336 = vpack.c.b16 %v326, %v325
    %v337 = vpack.c.b16 %v328, %v327
    %v338 = vpack.c.b16 %v330, %v329
    %347 = vmatprep.subr.bf16.mxu0 0
    %348 = vmatpush1.bf16.msra.mxu0 %v331
    %349 = vmatprep.subr.bf16.mxu0 0
    %350 = vmatpush1.bf16.msra.mxu0 %v332
    %351 = vmatprep.subr.bf16.mxu0 0
    %352 = vmatpush1.bf16.msra.mxu0 %v333
    %353 = vmatprep.subr.bf16.mxu0 0
    %354 = vmatpush1.bf16.msra.mxu0 %v334
    %355 = vmatprep.subr.bf16.mxu0 0
    %356 = vmatpush1.bf16.msra.mxu0 %v335
    %357 = vmatprep.subr.bf16.mxu0 0
    %358 = vmatpush1.bf16.msra.mxu0 %v336
    %359 = vmatprep.subr.bf16.mxu0 0
    %360 = vmatpush1.bf16.msra.mxu0 %v337
    %361 = vmatprep.subr.bf16.mxu0 0
    %362 = vmatpush1.bf16.msra.mxu0 %v338
    %363 = vmatprep.subr.bf16.mxu0 0
    %364 = vmatpush1.bf16.msra.mxu0 0
    %365 = vmatprep.subr.bf16.mxu0 0
    %366 = vmatpush1.bf16.msra.mxu0 0
    %367 = vmatprep.subr.bf16.mxu0 0
    %368 = vmatpush1.bf16.msra.mxu0 0
    %369 = vmatprep.subr.bf16.mxu0 0
    %370 = vmatpush1.bf16.msra.mxu0 0
    %371 = vmatprep.subr.bf16.mxu0 0
    %372 = vmatpush1.bf16.msra.mxu0 0
    %373 = vmatprep.subr.bf16.mxu0 0
    %374 = vmatpush1.bf16.msra.mxu0 0
    %375 = vmatprep.subr.bf16.mxu0 0
    %376 = vmatpush1.bf16.msra.mxu0 0
    %377 = vmatprep.subr.bf16.mxu0 0
    %378 = vmatpush1.bf16.msra.mxu0 0
    %379 = vmatprep.mubr.bf16.mxu0 0
    %380 = vmatmul.mubr.bf16.gmra.mrb[0].mxu0 %v277
    %v381 = vpop.f32.mrb[0].mxu0
    %v382 = vadd.f32 %v298, %v381
    %v383 = vpop.f32.mrb[0].mxu0
    %v384 = vpop.f32.mrb[0].mxu0
    %v385 = vadd.f32 %v298, %v384
    %v386 = vpop.f32.mrb[0].mxu0
    %387 = vdwg.mxu0
    %v388 = vtanh.pop %v382
    %v389 = vtanh.pop %v385
    %v390 = vpack.c.bf16 %v389, %v388
    %s391 = scalar_lea.vmem [#allocation8], 64
    %v392 = vld [vmem:[%s391] sm:$0xf]
    %v393 = vld [vmem:[%s391 + $0x4] sm:$0xf]
    %v394 = vld [vmem:[%s391 + $0x8] sm:$0xf]
    %v395 = vld [vmem:[%s391 + $0xc] sm:$0xf]
    %v396 = vld [vmem:[%s391 + $0x10] sm:$0xf]
    %v397 = vld [vmem:[%s391 + $0x14] sm:$0xf]
    %v398 = vld [vmem:[%s391 + $0x18] sm:$0xf]
    %v399 = vld [vmem:[%s391 + $0x1c] sm:$0xf]
    %v400 = vld [vmem:[%s391 + $0x20] sm:$0xf]
    %v401 = vld [vmem:[%s391 + $0x24] sm:$0xf]
    %v402 = vld [vmem:[%s391 + $0x28] sm:$0xf]
    %v403 = vld [vmem:[%s391 + $0x2c] sm:$0xf]
    %v404 = vld [vmem:[%s391 + $0x30] sm:$0xf]
    %v405 = vld [vmem:[%s391 + $0x34] sm:$0xf]
    %v406 = vld [vmem:[%s391 + $0x38] sm:$0xf]
    %v407 = vld [vmem:[%s391 + $0x3c] sm:$0xf]
    %v408 = vld [vmem:[%s4 + $0x2] sm:$0x1]
    %v409 = vlaneseq
    %v410 = vshrl.u32 %v409, 7
    %v411 = vsub.s32 0, %v410
    %v412 = vrot.slane %v408, %v411
    %v429 = vunpack.c.l.b16 %v392
    %v430 = vunpack.c.l.b16 %v393
    %v431 = vunpack.c.l.b16 %v394
    %v432 = vunpack.c.l.b16 %v395
    %v433 = vunpack.c.l.b16 %v396
    %v434 = vunpack.c.l.b16 %v397
    %v435 = vunpack.c.l.b16 %v398
    %v436 = vunpack.c.l.b16 %v399
    %v437 = vunpack.c.l.b16 %v400
    %v438 = vunpack.c.l.b16 %v401
    %v439 = vunpack.c.l.b16 %v402
    %v440 = vunpack.c.l.b16 %v403
    %v441 = vunpack.c.l.b16 %v404
    %v442 = vunpack.c.l.b16 %v405
    %v443 = vunpack.c.l.b16 %v406
    %v444 = vunpack.c.l.b16 %v407
    %v445 = vpack.c.b16 %v430, %v429
    %v446 = vpack.c.b16 %v432, %v431
    %v447 = vpack.c.b16 %v434, %v433
    %v448 = vpack.c.b16 %v436, %v435
    %v449 = vpack.c.b16 %v438, %v437
    %v450 = vpack.c.b16 %v440, %v439
    %v451 = vpack.c.b16 %v442, %v441
    %v452 = vpack.c.b16 %v444, %v443
    %461 = vmatprep.subr.bf16.mxu0 0
    %462 = vmatpush1.bf16.msra.mxu0 %v445
    %463 = vmatprep.subr.bf16.mxu0 0
    %464 = vmatpush1.bf16.msra.mxu0 %v446
    %465 = vmatprep.subr.bf16.mxu0 0
    %466 = vmatpush1.bf16.msra.mxu0 %v447
    %467 = vmatprep.subr.bf16.mxu0 0
    %468 = vmatpush1.bf16.msra.mxu0 %v448
    %469 = vmatprep.subr.bf16.mxu0 0
    %470 = vmatpush1.bf16.msra.mxu0 %v449
    %471 = vmatprep.subr.bf16.mxu0 0
    %472 = vmatpush1.bf16.msra.mxu0 %v450
    %473 = vmatprep.subr.bf16.mxu0 0
    %474 = vmatpush1.bf16.msra.mxu0 %v451
    %475 = vmatprep.subr.bf16.mxu0 0
    %476 = vmatpush1.bf16.msra.mxu0 %v452
    %477 = vmatprep.subr.bf16.mxu0 0
    %478 = vmatpush1.bf16.msra.mxu0 0
    %479 = vmatprep.subr.bf16.mxu0 0
    %480 = vmatpush1.bf16.msra.mxu0 0
    %481 = vmatprep.subr.bf16.mxu0 0
    %482 = vmatpush1.bf16.msra.mxu0 0
    %483 = vmatprep.subr.bf16.mxu0 0
    %484 = vmatpush1.bf16.msra.mxu0 0
    %485 = vmatprep.subr.bf16.mxu0 0
    %486 = vmatpush1.bf16.msra.mxu0 0
    %487 = vmatprep.subr.bf16.mxu0 0
    %488 = vmatpush1.bf16.msra.mxu0 0
    %489 = vmatprep.subr.bf16.mxu0 0
    %490 = vmatpush1.bf16.msra.mxu0 0
    %491 = vmatprep.subr.bf16.mxu0 0
    %492 = vmatpush1.bf16.msra.mxu0 0
    %493 = vmatprep.mubr.bf16.mxu0 0
    %494 = vmatmul.mubr.bf16.gmra.mrb[0].mxu0 %v390
    %v495 = vpop.f32.mrb[0].mxu0
    %v496 = vadd.f32 %v412, %v495
    %v497 = vpop.f32.mrb[0].mxu0
    %v498 = vpop.f32.mrb[0].mxu0
    %v499 = vadd.f32 %v412, %v498
    %v500 = vpop.f32.mrb[0].mxu0
    %501 = vdwg.mxu0
    %v502 = vtanh.pop %v496
    %v503 = vtanh.pop %v499
    %v504 = vpack.c.bf16 %v503, %v502
    %s505 = scalar_lea.vmem [#allocation8], 128
    %v506 = vld [vmem:[%s505] sm:$0xf]
    %v507 = vld [vmem:[%s505 + $0x4] sm:$0xf]
    %v508 = vld [vmem:[%s505 + $0x8] sm:$0xf]
    %v509 = vld [vmem:[%s505 + $0xc] sm:$0xf]
    %v510 = vld [vmem:[%s505 + $0x10] sm:$0xf]
    %v511 = vld [vmem:[%s505 + $0x14] sm:$0xf]
    %v512 = vld [vmem:[%s505 + $0x18] sm:$0xf]
    %v513 = vld [vmem:[%s505 + $0x1c] sm:$0xf]
    %v514 = vld [vmem:[%s505 + $0x20] sm:$0xf]
    %v515 = vld [vmem:[%s505 + $0x24] sm:$0xf]
    %v516 = vld [vmem:[%s505 + $0x28] sm:$0xf]
    %v517 = vld [vmem:[%s505 + $0x2c] sm:$0xf]
    %v518 = vld [vmem:[%s505 + $0x30] sm:$0xf]
    %v519 = vld [vmem:[%s505 + $0x34] sm:$0xf]
    %v520 = vld [vmem:[%s505 + $0x38] sm:$0xf]
    %v521 = vld [vmem:[%s505 + $0x3c] sm:$0xf]
    %v522 = vld [vmem:[%s4 + $0x3] sm:$0x1]
    %v523 = vlaneseq
    %v524 = vshrl.u32 %v523, 7
    %v525 = vsub.s32 0, %v524
    %v526 = vrot.slane %v522, %v525
    %v543 = vunpack.c.l.b16 %v506
    %v544 = vunpack.c.l.b16 %v507
    %v545 = vunpack.c.l.b16 %v508
    %v546 = vunpack.c.l.b16 %v509
    %v547 = vunpack.c.l.b16 %v510
    %v548 = vunpack.c.l.b16 %v511
    %v549 = vunpack.c.l.b16 %v512
    %v550 = vunpack.c.l.b16 %v513
    %v551 = vunpack.c.l.b16 %v514
    %v552 = vunpack.c.l.b16 %v515
    %v553 = vunpack.c.l.b16 %v516
    %v554 = vunpack.c.l.b16 %v517
    %v555 = vunpack.c.l.b16 %v518
    %v556 = vunpack.c.l.b16 %v519
    %v557 = vunpack.c.l.b16 %v520
    %v558 = vunpack.c.l.b16 %v521
    %v559 = vpack.c.b16 %v544, %v543
    %v560 = vpack.c.b16 %v546, %v545
    %v561 = vpack.c.b16 %v548, %v547
    %v562 = vpack.c.b16 %v550, %v549
    %v563 = vpack.c.b16 %v552, %v551
    %v564 = vpack.c.b16 %v554, %v553
    %v565 = vpack.c.b16 %v556, %v555
    %v566 = vpack.c.b16 %v558, %v557
    %575 = vmatprep.subr.bf16.mxu0 0
    %576 = vmatpush1.bf16.msra.mxu0 %v559
    %577 = vmatprep.subr.bf16.mxu0 0
    %578 = vmatpush1.bf16.msra.mxu0 %v560
    %579 = vmatprep.subr.bf16.mxu0 0
    %580 = vmatpush1.bf16.msra.mxu0 %v561
    %581 = vmatprep.subr.bf16.mxu0 0
    %582 = vmatpush1.bf16.msra.mxu0 %v562
    %583 = vmatprep.subr.bf16.mxu0 0
    %584 = vmatpush1.bf16.msra.mxu0 %v563
    %585 = vmatprep.subr.bf16.mxu0 0
    %586 = vmatpush1.bf16.msra.mxu0 %v564
    %587 = vmatprep.subr.bf16.mxu0 0
    %588 = vmatpush1.bf16.msra.mxu0 %v565
    %589 = vmatprep.subr.bf16.mxu0 0
    %590 = vmatpush1.bf16.msra.mxu0 %v566
    %591 = vmatprep.subr.bf16.mxu0 0
    %592 = vmatpush1.bf16.msra.mxu0 0
    %593 = vmatprep.subr.bf16.mxu0 0
    %594 = vmatpush1.bf16.msra.mxu0 0
    %595 = vmatprep.subr.bf16.mxu0 0
    %596 = vmatpush1.bf16.msra.mxu0 0
    %597 = vmatprep.subr.bf16.mxu0 0
    %598 = vmatpush1.bf16.msra.mxu0 0
    %599 = vmatprep.subr.bf16.mxu0 0
    %600 = vmatpush1.bf16.msra.mxu0 0
    %601 = vmatprep.subr.bf16.mxu0 0
    %602 = vmatpush1.bf16.msra.mxu0 0
    %603 = vmatprep.subr.bf16.mxu0 0
    %604 = vmatpush1.bf16.msra.mxu0 0
    %605 = vmatprep.subr.bf16.mxu0 0
    %606 = vmatpush1.bf16.msra.mxu0 0
    %607 = vmatprep.mubr.bf16.mxu0 0
    %608 = vmatmul.mubr.bf16.gmra.mrb[0].mxu0 %v504
    %v609 = vpop.f32.mrb[0].mxu0
    %v610 = vadd.f32 %v526, %v609
    %v611 = vpop.f32.mrb[0].mxu0
    %v612 = vpop.f32.mrb[0].mxu0
    %v613 = vadd.f32 %v526, %v612
    %v614 = vpop.f32.mrb[0].mxu0
    %615 = vdwg.mxu0
    %v616 = vtanh.pop %v610
    %v617 = vtanh.pop %v613
    %v618 = vpack.c.bf16 %v617, %v616
    %s619 = scalar_lea.vmem [#allocation8], 192
    %v620 = vld [vmem:[%s619] sm:$0xf]
    %v621 = vld [vmem:[%s619 + $0x4] sm:$0xf]
    %v622 = vld [vmem:[%s619 + $0x8] sm:$0xf]
    %v623 = vld [vmem:[%s619 + $0xc] sm:$0xf]
    %v624 = vld [vmem:[%s619 + $0x10] sm:$0xf]
    %v625 = vld [vmem:[%s619 + $0x14] sm:$0xf]
    %v626 = vld [vmem:[%s619 + $0x18] sm:$0xf]
    %v627 = vld [vmem:[%s619 + $0x1c] sm:$0xf]
    %v628 = vld [vmem:[%s619 + $0x20] sm:$0xf]
    %v629 = vld [vmem:[%s619 + $0x24] sm:$0xf]
    %v630 = vld [vmem:[%s619 + $0x28] sm:$0xf]
    %v631 = vld [vmem:[%s619 + $0x2c] sm:$0xf]
    %v632 = vld [vmem:[%s619 + $0x30] sm:$0xf]
    %v633 = vld [vmem:[%s619 + $0x34] sm:$0xf]
    %v634 = vld [vmem:[%s619 + $0x38] sm:$0xf]
    %v635 = vld [vmem:[%s619 + $0x3c] sm:$0xf]
    %v636 = vld [vmem:[%s4 + $0x4] sm:$0x1]
    %v637 = vlaneseq
    %v638 = vshrl.u32 %v637, 7
    %v639 = vsub.s32 0, %v638
    %v640 = vrot.slane %v636, %v639
    %v657 = vunpack.c.l.b16 %v620
    %v658 = vunpack.c.l.b16 %v621
    %v659 = vunpack.c.l.b16 %v622
    %v660 = vunpack.c.l.b16 %v623
    %v661 = vunpack.c.l.b16 %v624
    %v662 = vunpack.c.l.b16 %v625
    %v663 = vunpack.c.l.b16 %v626
    %v664 = vunpack.c.l.b16 %v627
    %v665 = vunpack.c.l.b16 %v628
    %v666 = vunpack.c.l.b16 %v629
    %v667 = vunpack.c.l.b16 %v630
    %v668 = vunpack.c.l.b16 %v631
    %v669 = vunpack.c.l.b16 %v632
    %v670 = vunpack.c.l.b16 %v633
    %v671 = vunpack.c.l.b16 %v634
    %v672 = vunpack.c.l.b16 %v635
    %v673 = vpack.c.b16 %v658, %v657
    %v674 = vpack.c.b16 %v660, %v659
    %v675 = vpack.c.b16 %v662, %v661
    %v676 = vpack.c.b16 %v664, %v663
    %v677 = vpack.c.b16 %v666, %v665
    %v678 = vpack.c.b16 %v668, %v667
    %v679 = vpack.c.b16 %v670, %v669
    %v680 = vpack.c.b16 %v672, %v671
    %689 = vmatprep.subr.bf16.mxu0 0
    %690 = vmatpush1.bf16.msra.mxu0 %v673
    %691 = vmatprep.subr.bf16.mxu0 0
    %692 = vmatpush1.bf16.msra.mxu0 %v674
    %693 = vmatprep.subr.bf16.mxu0 0
    %694 = vmatpush1.bf16.msra.mxu0 %v675
    %695 = vmatprep.subr.bf16.mxu0 0
    %696 = vmatpush1.bf16.msra.mxu0 %v676
    %697 = vmatprep.subr.bf16.mxu0 0
    %698 = vmatpush1.bf16.msra.mxu0 %v677
    %699 = vmatprep.subr.bf16.mxu0 0
    %700 = vmatpush1.bf16.msra.mxu0 %v678
    %701 = vmatprep.subr.bf16.mxu0 0
    %702 = vmatpush1.bf16.msra.mxu0 %v679
    %703 = vmatprep.subr.bf16.mxu0 0
    %704 = vmatpush1.bf16.msra.mxu0 %v680
    %705 = vmatprep.subr.bf16.mxu0 0
    %706 = vmatpush1.bf16.msra.mxu0 0
    %707 = vmatprep.subr.bf16.mxu0 0
    %708 = vmatpush1.bf16.msra.mxu0 0
    %709 = vmatprep.subr.bf16.mxu0 0
    %710 = vmatpush1.bf16.msra.mxu0 0
    %711 = vmatprep.subr.bf16.mxu0 0
    %712 = vmatpush1.bf16.msra.mxu0 0
    %713 = vmatprep.subr.bf16.mxu0 0
    %714 = vmatpush1.bf16.msra.mxu0 0
    %715 = vmatprep.subr.bf16.mxu0 0
    %716 = vmatpush1.bf16.msra.mxu0 0
    %717 = vmatprep.subr.bf16.mxu0 0
    %718 = vmatpush1.bf16.msra.mxu0 0
    %719 = vmatprep.subr.bf16.mxu0 0
    %720 = vmatpush1.bf16.msra.mxu0 0
    %721 = vmatprep.mubr.bf16.mxu0 0
    %722 = vmatmul.mubr.bf16.gmra.mrb[0].mxu0 %v618
    %v723 = vpop.f32.mrb[0].mxu0
    %v724 = vadd.f32 %v640, %v723
    %v725 = vpop.f32.mrb[0].mxu0
    %v726 = vpop.f32.mrb[0].mxu0
    %v727 = vadd.f32 %v640, %v726
    %v728 = vpop.f32.mrb[0].mxu0
    %729 = vdwg.mxu0
    %v730 = vtanh.pop %v724
    %v731 = vtanh.pop %v727
    %v732 = vpack.c.bf16 %v731, %v730
    %s733 = scalar_lea.vmem [#allocation8], 256
    %v734 = vld [vmem:[%s733] sm:$0xf]
    %v735 = vld [vmem:[%s733 + $0x4] sm:$0xf]
    %v736 = vld [vmem:[%s733 + $0x8] sm:$0xf]
    %v737 = vld [vmem:[%s733 + $0xc] sm:$0xf]
    %v738 = vld [vmem:[%s733 + $0x10] sm:$0xf]
    %v739 = vld [vmem:[%s733 + $0x14] sm:$0xf]
    %v740 = vld [vmem:[%s733 + $0x18] sm:$0xf]
    %v741 = vld [vmem:[%s733 + $0x1c] sm:$0xf]
    %v742 = vld [vmem:[%s733 + $0x20] sm:$0xf]
    %v743 = vld [vmem:[%s733 + $0x24] sm:$0xf]
    %v744 = vld [vmem:[%s733 + $0x28] sm:$0xf]
    %v745 = vld [vmem:[%s733 + $0x2c] sm:$0xf]
    %v746 = vld [vmem:[%s733 + $0x30] sm:$0xf]
    %v747 = vld [vmem:[%s733 + $0x34] sm:$0xf]
    %v748 = vld [vmem:[%s733 + $0x38] sm:$0xf]
    %v749 = vld [vmem:[%s733 + $0x3c] sm:$0xf]
    %v750 = vld [vmem:[%s4 + $0x5] sm:$0x1]
    %v751 = vlaneseq
    %v752 = vshrl.u32 %v751, 7
    %v753 = vsub.s32 0, %v752
    %v754 = vrot.slane %v750, %v753
    %v771 = vunpack.c.l.b16 %v734
    %v772 = vunpack.c.l.b16 %v735
    %v773 = vunpack.c.l.b16 %v736
    %v774 = vunpack.c.l.b16 %v737
    %v775 = vunpack.c.l.b16 %v738
    %v776 = vunpack.c.l.b16 %v739
    %v777 = vunpack.c.l.b16 %v740
    %v778 = vunpack.c.l.b16 %v741
    %v779 = vunpack.c.l.b16 %v742
    %v780 = vunpack.c.l.b16 %v743
    %v781 = vunpack.c.l.b16 %v744
    %v782 = vunpack.c.l.b16 %v745
    %v783 = vunpack.c.l.b16 %v746
    %v784 = vunpack.c.l.b16 %v747
    %v785 = vunpack.c.l.b16 %v748
    %v786 = vunpack.c.l.b16 %v749
    %v787 = vpack.c.b16 %v772, %v771
    %v788 = vpack.c.b16 %v774, %v773
    %v789 = vpack.c.b16 %v776, %v775
    %v790 = vpack.c.b16 %v778, %v777
    %v791 = vpack.c.b16 %v780, %v779
    %v792 = vpack.c.b16 %v782, %v781
    %v793 = vpack.c.b16 %v784, %v783
    %v794 = vpack.c.b16 %v786, %v785
    %803 = vmatprep.subr.bf16.mxu0 0
    %804 = vmatpush1.bf16.msra.mxu0 %v787
    %805 = vmatprep.subr.bf16.mxu0 0
    %806 = vmatpush1.bf16.msra.mxu0 %v788
    %807 = vmatprep.subr.bf16.mxu0 0
    %808 = vmatpush1.bf16.msra.mxu0 %v789
    %809 = vmatprep.subr.bf16.mxu0 0
    %810 = vmatpush1.bf16.msra.mxu0 %v790
    %811 = vmatprep.subr.bf16.mxu0 0
    %812 = vmatpush1.bf16.msra.mxu0 %v791
    %813 = vmatprep.subr.bf16.mxu0 0
    %814 = vmatpush1.bf16.msra.mxu0 %v792
    %815 = vmatprep.subr.bf16.mxu0 0
    %816 = vmatpush1.bf16.msra.mxu0 %v793
    %817 = vmatprep.subr.bf16.mxu0 0
    %818 = vmatpush1.bf16.msra.mxu0 %v794
    %819 = vmatprep.subr.bf16.mxu0 0
    %820 = vmatpush1.bf16.msra.mxu0 0
    %821 = vmatprep.subr.bf16.mxu0 0
    %822 = vmatpush1.bf16.msra.mxu0 0
    %823 = vmatprep.subr.bf16.mxu0 0
    %824 = vmatpush1.bf16.msra.mxu0 0
    %825 = vmatprep.subr.bf16.mxu0 0
    %826 = vmatpush1.bf16.msra.mxu0 0
    %827 = vmatprep.subr.bf16.mxu0 0
    %828 = vmatpush1.bf16.msra.mxu0 0
    %829 = vmatprep.subr.bf16.mxu0 0
    %830 = vmatpush1.bf16.msra.mxu0 0
    %831 = vmatprep.subr.bf16.mxu0 0
    %832 = vmatpush1.bf16.msra.mxu0 0
    %833 = vmatprep.subr.bf16.mxu0 0
    %834 = vmatpush1.bf16.msra.mxu0 0
    %835 = vmatprep.mubr.bf16.mxu0 0
    %836 = vmatmul.mubr.bf16.gmra.mrb[0].mxu0 %v732
    %v837 = vpop.f32.mrb[0].mxu0
    %v838 = vadd.f32 %v754, %v837
    %v839 = vpop.f32.mrb[0].mxu0
    %v840 = vpop.f32.mrb[0].mxu0
    %v841 = vadd.f32 %v754, %v840
    %v842 = vpop.f32.mrb[0].mxu0
    %843 = vdwg.mxu0
    %v844 = vtanh.pop %v838
    %v845 = vtanh.pop %v841
    %v846 = vpack.c.bf16 %v845, %v844
    %s847 = scalar_lea.vmem [#allocation8], 320
    %v848 = vld [vmem:[%s847] sm:$0xf]
    %v849 = vld [vmem:[%s847 + $0x4] sm:$0xf]
    %v850 = vld [vmem:[%s847 + $0x8] sm:$0xf]
    %v851 = vld [vmem:[%s847 + $0xc] sm:$0xf]
    %v852 = vld [vmem:[%s847 + $0x10] sm:$0xf]
    %v853 = vld [vmem:[%s847 + $0x14] sm:$0xf]
    %v854 = vld [vmem:[%s847 + $0x18] sm:$0xf]
    %v855 = vld [vmem:[%s847 + $0x1c] sm:$0xf]
    %v856 = vld [vmem:[%s847 + $0x20] sm:$0xf]
    %v857 = vld [vmem:[%s847 + $0x24] sm:$0xf]
    %v858 = vld [vmem:[%s847 + $0x28] sm:$0xf]
    %v859 = vld [vmem:[%s847 + $0x2c] sm:$0xf]
    %v860 = vld [vmem:[%s847 + $0x30] sm:$0xf]
    %v861 = vld [vmem:[%s847 + $0x34] sm:$0xf]
    %v862 = vld [vmem:[%s847 + $0x38] sm:$0xf]
    %v863 = vld [vmem:[%s847 + $0x3c] sm:$0xf]
    %v864 = vld [vmem:[%s4 + $0x6] sm:$0x1]
    %v865 = vlaneseq
    %v866 = vshrl.u32 %v865, 7
    %v867 = vsub.s32 0, %v866
    %v868 = vrot.slane %v864, %v867
    %v885 = vunpack.c.l.b16 %v848
    %v886 = vunpack.c.l.b16 %v849
    %v887 = vunpack.c.l.b16 %v850
    %v888 = vunpack.c.l.b16 %v851
    %v889 = vunpack.c.l.b16 %v852
    %v890 = vunpack.c.l.b16 %v853
    %v891 = vunpack.c.l.b16 %v854
    %v892 = vunpack.c.l.b16 %v855
    %v893 = vunpack.c.l.b16 %v856
    %v894 = vunpack.c.l.b16 %v857
    %v895 = vunpack.c.l.b16 %v858
    %v896 = vunpack.c.l.b16 %v859
    %v897 = vunpack.c.l.b16 %v860
    %v898 = vunpack.c.l.b16 %v861
    %v899 = vunpack.c.l.b16 %v862
    %v900 = vunpack.c.l.b16 %v863
    %v901 = vpack.c.b16 %v886, %v885
    %v902 = vpack.c.b16 %v888, %v887
    %v903 = vpack.c.b16 %v890, %v889
    %v904 = vpack.c.b16 %v892, %v891
    %v905 = vpack.c.b16 %v894, %v893
    %v906 = vpack.c.b16 %v896, %v895
    %v907 = vpack.c.b16 %v898, %v897
    %v908 = vpack.c.b16 %v900, %v899
    %917 = vmatprep.subr.bf16.mxu0 0
    %918 = vmatpush1.bf16.msra.mxu0 %v901
    %919 = vmatprep.subr.bf16.mxu0 0
    %920 = vmatpush1.bf16.msra.mxu0 %v902
    %921 = vmatprep.subr.bf16.mxu0 0
    %922 = vmatpush1.bf16.msra.mxu0 %v903
    %923 = vmatprep.subr.bf16.mxu0 0
    %924 = vmatpush1.bf16.msra.mxu0 %v904
    %925 = vmatprep.subr.bf16.mxu0 0
    %926 = vmatpush1.bf16.msra.mxu0 %v905
    %927 = vmatprep.subr.bf16.mxu0 0
    %928 = vmatpush1.bf16.msra.mxu0 %v906
    %929 = vmatprep.subr.bf16.mxu0 0
    %930 = vmatpush1.bf16.msra.mxu0 %v907
    %931 = vmatprep.subr.bf16.mxu0 0
    %932 = vmatpush1.bf16.msra.mxu0 %v908
    %933 = vmatprep.subr.bf16.mxu0 0
    %934 = vmatpush1.bf16.msra.mxu0 0
    %935 = vmatprep.subr.bf16.mxu0 0
    %936 = vmatpush1.bf16.msra.mxu0 0
    %937 = vmatprep.subr.bf16.mxu0 0
    %938 = vmatpush1.bf16.msra.mxu0 0
    %939 = vmatprep.subr.bf16.mxu0 0
    %940 = vmatpush1.bf16.msra.mxu0 0
    %941 = vmatprep.subr.bf16.mxu0 0
    %942 = vmatpush1.bf16.msra.mxu0 0
    %943 = vmatprep.subr.bf16.mxu0 0
    %944 = vmatpush1.bf16.msra.mxu0 0
    %945 = vmatprep.subr.bf16.mxu0 0
    %946 = vmatpush1.bf16.msra.mxu0 0
    %947 = vmatprep.subr.bf16.mxu0 0
    %948 = vmatpush1.bf16.msra.mxu0 0
    %949 = vmatprep.mubr.bf16.mxu0 0
    %950 = vmatmul.mubr.bf16.gmra.mrb[0].mxu0 %v846
    %v951 = vpop.f32.mrb[0].mxu0
    %v952 = vadd.f32 %v868, %v951
    %v953 = vpop.f32.mrb[0].mxu0
    %v954 = vpop.f32.mrb[0].mxu0
    %v955 = vadd.f32 %v868, %v954
    %v956 = vpop.f32.mrb[0].mxu0
    %957 = vdwg.mxu0
    %v958 = vtanh.pop %v952
    %v959 = vtanh.pop %v955
    %v960 = vpack.c.bf16 %v959, %v958
    %s961 = scalar_lea.vmem [#allocation8], 384
    %v962 = vld [vmem:[%s961] sm:$0xf]
    %v963 = vld [vmem:[%s961 + $0x4] sm:$0xf]
    %v964 = vld [vmem:[%s961 + $0x8] sm:$0xf]
    %v965 = vld [vmem:[%s961 + $0xc] sm:$0xf]
    %v966 = vld [vmem:[%s961 + $0x10] sm:$0xf]
    %v967 = vld [vmem:[%s961 + $0x14] sm:$0xf]
    %v968 = vld [vmem:[%s961 + $0x18] sm:$0xf]
    %v969 = vld [vmem:[%s961 + $0x1c] sm:$0xf]
    %v970 = vld [vmem:[%s961 + $0x20] sm:$0xf]
    %v971 = vld [vmem:[%s961 + $0x24] sm:$0xf]
    %v972 = vld [vmem:[%s961 + $0x28] sm:$0xf]
    %v973 = vld [vmem:[%s961 + $0x2c] sm:$0xf]
    %v974 = vld [vmem:[%s961 + $0x30] sm:$0xf]
    %v975 = vld [vmem:[%s961 + $0x34] sm:$0xf]
    %v976 = vld [vmem:[%s961 + $0x38] sm:$0xf]
    %v977 = vld [vmem:[%s961 + $0x3c] sm:$0xf]
    %v978 = vld [vmem:[%s4 + $0x7] sm:$0x1]
    %v979 = vlaneseq
    %v980 = vshrl.u32 %v979, 7
    %v981 = vsub.s32 0, %v980
    %v982 = vrot.slane %v978, %v981
    %v999 = vunpack.c.l.b16 %v962
    %v1000 = vunpack.c.l.b16 %v963
    %v1001 = vunpack.c.l.b16 %v964
    %v1002 = vunpack.c.l.b16 %v965
    %v1003 = vunpack.c.l.b16 %v966
    %v1004 = vunpack.c.l.b16 %v967
    %v1005 = vunpack.c.l.b16 %v968
    %v1006 = vunpack.c.l.b16 %v969
    %v1007 = vunpack.c.l.b16 %v970
    %v1008 = vunpack.c.l.b16 %v971
    %v1009 = vunpack.c.l.b16 %v972
    %v1010 = vunpack.c.l.b16 %v973
    %v1011 = vunpack.c.l.b16 %v974
    %v1012 = vunpack.c.l.b16 %v975
    %v1013 = vunpack.c.l.b16 %v976
    %v1014 = vunpack.c.l.b16 %v977
    %v1015 = vpack.c.b16 %v1000, %v999
    %v1016 = vpack.c.b16 %v1002, %v1001
    %v1017 = vpack.c.b16 %v1004, %v1003
    %v1018 = vpack.c.b16 %v1006, %v1005
    %v1019 = vpack.c.b16 %v1008, %v1007
    %v1020 = vpack.c.b16 %v1010, %v1009
    %v1021 = vpack.c.b16 %v1012, %v1011
    %v1022 = vpack.c.b16 %v1014, %v1013
    %1031 = vmatprep.subr.bf16.mxu0 0
    %1032 = vmatpush1.bf16.msra.mxu0 %v1015
    %1033 = vmatprep.subr.bf16.mxu0 0
    %1034 = vmatpush1.bf16.msra.mxu0 %v1016
    %1035 = vmatprep.subr.bf16.mxu0 0
    %1036 = vmatpush1.bf16.msra.mxu0 %v1017
    %1037 = vmatprep.subr.bf16.mxu0 0
    %1038 = vmatpush1.bf16.msra.mxu0 %v1018
    %1039 = vmatprep.subr.bf16.mxu0 0
    %1040 = vmatpush1.bf16.msra.mxu0 %v1019
    %1041 = vmatprep.subr.bf16.mxu0 0
    %1042 = vmatpush1.bf16.msra.mxu0 %v1020
    %1043 = vmatprep.subr.bf16.mxu0 0
    %1044 = vmatpush1.bf16.msra.mxu0 %v1021
    %1045 = vmatprep.subr.bf16.mxu0 0
    %1046 = vmatpush1.bf16.msra.mxu0 %v1022
    %1047 = vmatprep.subr.bf16.mxu0 0
    %1048 = vmatpush1.bf16.msra.mxu0 0
    %1049 = vmatprep.subr.bf16.mxu0 0
    %1050 = vmatpush1.bf16.msra.mxu0 0
    %1051 = vmatprep.subr.bf16.mxu0 0
    %1052 = vmatpush1.bf16.msra.mxu0 0
    %1053 = vmatprep.subr.bf16.mxu0 0
    %1054 = vmatpush1.bf16.msra.mxu0 0
    %1055 = vmatprep.subr.bf16.mxu0 0
    %1056 = vmatpush1.bf16.msra.mxu0 0
    %1057 = vmatprep.subr.bf16.mxu0 0
    %1058 = vmatpush1.bf16.msra.mxu0 0
    %1059 = vmatprep.subr.bf16.mxu0 0
    %1060 = vmatpush1.bf16.msra.mxu0 0
    %1061 = vmatprep.subr.bf16.mxu0 0
    %1062 = vmatpush1.bf16.msra.mxu0 0
    %1063 = vmatprep.mubr.bf16.mxu0 0
    %1064 = vmatmul.mubr.bf16.gmra.mrb[0].mxu0 %v960
    %v1065 = vpop.f32.mrb[0].mxu0
    %v1066 = vadd.f32 %v982, %v1065
    %v1067 = vpop.f32.mrb[0].mxu0
    %v1068 = vpop.f32.mrb[0].mxu0
    %v1069 = vadd.f32 %v982, %v1068
    %v1070 = vpop.f32.mrb[0].mxu0
    %1071 = vdwg.mxu0
    %v1072 = vtanh.pop %v1066
    %v1073 = vtanh.pop %v1069
    %v1074 = vpack.c.bf16 %v1073, %v1072
    %v1075 = vld [vmem:[#allocation10] sm:$0xff]
    %v1076 = vld [vmem:[#allocation10 + $0x8] sm:$0xff]
    %v1077 = vld [vmem:[#allocation10 + $0x10] sm:$0xff]
    %v1078 = vld [vmem:[#allocation10 + $0x18] sm:$0xff]
    %v1079 = vld [vmem:[#allocation10 + $0x20] sm:$0xff]
    %v1080 = vld [vmem:[#allocation10 + $0x28] sm:$0xff]
    %v1081 = vld [vmem:[#allocation10 + $0x30] sm:$0xff]
    %v1082 = vld [vmem:[#allocation10 + $0x38] sm:$0xff]
    %v1083 = vld [vmem:[#allocation10 + $0x40] sm:$0xff]
    %v1084 = vld [vmem:[#allocation10 + $0x48] sm:$0xff]
    %v1085 = vld [vmem:[#allocation10 + $0x50] sm:$0xff]
    %v1086 = vld [vmem:[#allocation10 + $0x58] sm:$0xff]
    %v1087 = vld [vmem:[#allocation10 + $0x60] sm:$0xff]
    %v1088 = vld [vmem:[#allocation10 + $0x68] sm:$0xff]
    %v1089 = vld [vmem:[#allocation10 + $0x70] sm:$0xff]
    %v1090 = vld [vmem:[#allocation10 + $0x78] sm:$0xff]
    %v1091 = vld [vmem:[%s6] sm:$0x3]
    %v1093 = vlaneseq
    %v1094 = vshrl.u32 %v1093, 7
    %v1095 = vsub.s32 0, %v1094
    %v1096 = vrot.slane %v1091, %v1095
    %v1097 = vlaneseq
    %v1098 = vshrl.u32 %v1097, 7
    %v1099 = vsub.s32 1, %v1098
    %v1100 = vrot.slane %v1091, %v1099
    %v1119 = vunpack.c.l.b16 %v1075
    %v1120 = vunpack.c.h.b16 %v1075
    %v1121 = vunpack.c.l.b16 %v1076
    %v1122 = vunpack.c.h.b16 %v1076
    %v1123 = vunpack.c.l.b16 %v1077
    %v1124 = vunpack.c.h.b16 %v1077
    %v1125 = vunpack.c.l.b16 %v1078
    %v1126 = vunpack.c.h.b16 %v1078
    %v1127 = vunpack.c.l.b16 %v1079
    %v1128 = vunpack.c.h.b16 %v1079
    %v1129 = vunpack.c.l.b16 %v1080
    %v1130 = vunpack.c.h.b16 %v1080
    %v1131 = vunpack.c.l.b16 %v1081
    %v1132 = vunpack.c.h.b16 %v1081
    %v1133 = vunpack.c.l.b16 %v1082
    %v1134 = vunpack.c.h.b16 %v1082
    %v1135 = vunpack.c.l.b16 %v1083
    %v1136 = vunpack.c.h.b16 %v1083
    %v1137 = vunpack.c.l.b16 %v1084
    %v1138 = vunpack.c.h.b16 %v1084
    %v1139 = vunpack.c.l.b16 %v1085
    %v1140 = vunpack.c.h.b16 %v1085
    %v1141 = vunpack.c.l.b16 %v1086
    %v1142 = vunpack.c.h.b16 %v1086
    %v1143 = vunpack.c.l.b16 %v1087
    %v1144 = vunpack.c.h.b16 %v1087
    %v1145 = vunpack.c.l.b16 %v1088
    %v1146 = vunpack.c.h.b16 %v1088
    %v1147 = vunpack.c.l.b16 %v1089
    %v1148 = vunpack.c.h.b16 %v1089
    %v1149 = vunpack.c.l.b16 %v1090
    %v1150 = vunpack.c.h.b16 %v1090
    %v1151 = vpack.c.b16 %v1121, %v1119
    %v1152 = vpack.c.b16 %v1122, %v1120
    %v1153 = vpack.c.b16 %v1125, %v1123
    %v1154 = vpack.c.b16 %v1126, %v1124
    %v1155 = vpack.c.b16 %v1129, %v1127
    %v1156 = vpack.c.b16 %v1130, %v1128
    %v1157 = vpack.c.b16 %v1133, %v1131
    %v1158 = vpack.c.b16 %v1134, %v1132
    %v1159 = vpack.c.b16 %v1137, %v1135
    %v1160 = vpack.c.b16 %v1138, %v1136
    %v1161 = vpack.c.b16 %v1141, %v1139
    %v1162 = vpack.c.b16 %v1142, %v1140
    %v1163 = vpack.c.b16 %v1145, %v1143
    %v1164 = vpack.c.b16 %v1146, %v1144
    %v1165 = vpack.c.b16 %v1149, %v1147
    %v1166 = vpack.c.b16 %v1150, %v1148
    %1183 = vmatprep.subr.bf16.mxu0 %v1152
    %1184 = vmatpush1.bf16.msra.mxu0 %v1151
    %1185 = vmatprep.subr.bf16.mxu0 %v1154
    %1186 = vmatpush1.bf16.msra.mxu0 %v1153
    %1187 = vmatprep.subr.bf16.mxu0 %v1156
    %1188 = vmatpush1.bf16.msra.mxu0 %v1155
    %1189 = vmatprep.subr.bf16.mxu0 %v1158
    %1190 = vmatpush1.bf16.msra.mxu0 %v1157
    %1191 = vmatprep.subr.bf16.mxu0 %v1160
    %1192 = vmatpush1.bf16.msra.mxu0 %v1159
    %1193 = vmatprep.subr.bf16.mxu0 %v1162
    %1194 = vmatpush1.bf16.msra.mxu0 %v1161
    %1195 = vmatprep.subr.bf16.mxu0 %v1164
    %1196 = vmatpush1.bf16.msra.mxu0 %v1163
    %1197 = vmatprep.subr.bf16.mxu0 %v1166
    %1198 = vmatpush1.bf16.msra.mxu0 %v1165
    %1199 = vmatprep.subr.bf16.mxu0 0
    %1200 = vmatpush1.bf16.msra.mxu0 0
    %1201 = vmatprep.subr.bf16.mxu0 0
    %1202 = vmatpush1.bf16.msra.mxu0 0
    %1203 = vmatprep.subr.bf16.mxu0 0
    %1204 = vmatpush1.bf16.msra.mxu0 0
    %1205 = vmatprep.subr.bf16.mxu0 0
    %1206 = vmatpush1.bf16.msra.mxu0 0
    %1207 = vmatprep.subr.bf16.mxu0 0
    %1208 = vmatpush1.bf16.msra.mxu0 0
    %1209 = vmatprep.subr.bf16.mxu0 0
    %1210 = vmatpush1.bf16.msra.mxu0 0
    %1211 = vmatprep.subr.bf16.mxu0 0
    %1212 = vmatpush1.bf16.msra.mxu0 0
    %1213 = vmatprep.subr.bf16.mxu0 0
    %1214 = vmatpush1.bf16.msra.mxu0 0
    %1215 = vmatprep.mubr.bf16.mxu0 0
    %1216 = vmatmul.mubr.bf16.gmra.mrb[0].mxu0 %v1074
    %v1217 = vpop.f32.mrb[0].mxu0
    %v1218 = vadd.f32 %v1096, %v1217
    %v1219 = vpop.f32.mrb[0].mxu0
    %v1220 = vadd.f32 %v1100, %v1219
    %v1221 = vpop.f32.mrb[0].mxu0
    %v1222 = vadd.f32 %v1096, %v1221
    %v1223 = vpop.f32.mrb[0].mxu0
    %v1224 = vadd.f32 %v1100, %v1223
    %1225 = vdwg.mxu0
    %1226 = vst [vmem:[#allocation11] sm:$0xff] %v1218
    %1227 = vst [vmem:[#allocation11 + $0x8] sm:$0xff] %v1220
    %1228 = vst [vmem:[#allocation12] sm:$0xff] %v1222
    %1229 = vst [vmem:[#allocation12 + $0x8] sm:$0xff] %v1224
    // Predicated region
    $region50: #{mlp_module_forward.1} parent=1 // pred_check
      _
    $region51: #{mlp_module_forward.1} parent=1 // pred_check_branch
      %1231 = sbr.rel (0) target = $region53
    $region52: #{mlp_module_forward.1} parent=1 // pred_region
      %s1233 = ssub.s32 256, 256
      %1234 = vsyncadd [#allocation4], %s1233
      %s1236 = sshll.u32 [#allocation11], 4
      %s1237 = int_to_ptr.vmem [resolvable:$true] %s1236
      %1239 = dma.vmem_to_hbm [thread:$0]  %s1237, 256, %s7, [#allocation4]
    $region53: #{mlp_module_forward.1} parent=1 // pred_fallthru
      _
    // Predicated region
    $region54: #{mlp_module_forward.1} parent=1 // pred_check
      _
    $region55: #{mlp_module_forward.1} parent=1 // pred_check_branch
      %1241 = sbr.rel (0) target = $region57
    $region56: #{mlp_module_forward.1} parent=1 // pred_region
      %s1243 = ssub.s32 256, 256
      %1244 = vsyncadd [#allocation13], %s1243
      %s1246 = sshll.u32 [#allocation12], 4
      %s1247 = int_to_ptr.vmem [resolvable:$true] %s1246
      %1249 = dma.vmem_to_hbm [thread:$0]  %s1247, 256, %s8, [#allocation13]
    $region57: #{mlp_module_forward.1} parent=1 // pred_fallthru
      _
    // Predicated region
    $region58: #{mlp_module_forward.1} parent=1 // pred_check
      _
    $region59: #{mlp_module_forward.1} parent=1 // pred_check_branch
      %1251 = sbr.rel (0) target = $region61
    $region60: #{mlp_module_forward.1} parent=1 // pred_region
      %1252 = dma.done [#allocation4], 256
    $region61: #{mlp_module_forward.1} parent=1 // pred_fallthru
      _
    // Predicated region
    $region62: #{mlp_module_forward.1} parent=1 // pred_check
      _
    $region63: #{mlp_module_forward.1} parent=1 // pred_check_branch
      %1254 = sbr.rel (0) target = $region65
    $region64: #{mlp_module_forward.1} parent=1 // pred_region
      %1255 = dma.done [#allocation13], 256
    $region65: #{mlp_module_forward.1} parent=1 // pred_fallthru
      _
    %1256 = vsyncpa [#allocation3], 1
    %1257 = vsyncpa [#allocation6], 1
    %1258 = vsyncpa [#allocation9], 1
    %1259 = vsyncpa [#allocation4], 1
    %1260 = vsyncpa [#allocation13], 1

</llo_original>
